<compile_context>
chip_gen: v7x
topology: tpu7x:2x2x1
jax: 0.10.0
libtpu: 0.0.40
codegen_flags: <defaults>
</compile_context>

<pallas_src>
import functools
import math

import jax
import jax.numpy as jnp
from jax.experimental import pallas as pl
from jax.experimental.pallas import tpu as pltpu


def _round_up(x: int, m: int) -> int:
    return ((x + m - 1) // m) * m


def _tile_dim(dim: int, max_tile: int, align: int):
    """Balanced chunking: pick chunk count first, then an aligned tile size.

    Returns (tile, padded_dim). Guarantees tile % align == 0 or tile == padded_dim.
    """
    if dim <= max_tile:
        t = _round_up(dim, align)
        return t, t
    chunks = -(-dim // max_tile)              # ceil div
    t = _round_up(-(-dim // chunks), align)   # balanced tile, aligned up
    return t, _round_up(dim, t)


def _kernel_acc_in_out(x_ref, wT_ref, b_ref, o_ref):
    """f32-output path: the resident output block is the accumulator."""
    k = pl.program_id(2)

    @pl.when(k == 0)
    def _init():
        # Initialize with the broadcast bias instead of zeros — bias add is free.
        o_ref[...] = jnp.broadcast_to(b_ref[...], o_ref.shape).astype(o_ref.dtype)

    o_ref[...] += jnp.dot(x_ref[...], wT_ref[...],
                          preferred_element_type=jnp.float32)


def _kernel_scratch_acc(x_ref, wT_ref, b_ref, o_ref, acc_ref):
    """Sub-f32-output path: accumulate in an f32 VMEM scratch, cast out once."""
    k = pl.program_id(2)

    @pl.when(k == 0)
    def _init():
        acc_ref[...] = jnp.broadcast_to(b_ref[...], acc_ref.shape)

    acc_ref[...] += jnp.dot(x_ref[...], wT_ref[...],
                            preferred_element_type=jnp.float32)

    @pl.when(k == pl.num_programs(2) - 1)
    def _finalize():
        o_ref[...] = acc_ref[...].astype(o_ref.dtype)


def _auto_vmem_limit() -> int:
    try:
        cap = pltpu.get_tpu_info().vmem_capacity_bytes
        # Leave headroom below physical for compiler internal scratch.
        return min(96 * 1024 * 1024, int(cap) * 3 // 4)
    except Exception:
        return 48 * 1024 * 1024  # safe on v5e/v6e (128 MiB) and v7x (64 MiB)


def bayes_linear_forward(
    x: jax.Array,
    weight: jax.Array,
    bias: jax.Array,
    *,
    mxu_dtype=None,                 # e.g. jnp.bfloat16 on v6e/v7x; None = keep input dtype
    tm_max: int = 512,
    tn_max: int = 512,
    tk_max: int = 1024,
    vmem_limit_bytes: int | None = None,
) -> jax.Array:
    """y = x @ weight.T + bias  (torch.nn.functional.linear semantics).

    x:      (M, K)
    weight: (N, K)  (PyTorch (n_outputs, n_inputs) convention)
    bias:   (N,)
    returns (M, N) in x's original dtype.
    """
    M, K = x.shape
    N, K2 = weight.shape
    assert K == K2, "weight inner dim must match input features"
    assert bias.shape == (N,)

    out_dtype = x.dtype

    # --- one-time wrapper-side layout / dtype plumbing (not in the hot loop) ---
    # Pre-transpose to (K, N) so the kernel gets canonical (tk, tn) rhs blocks
    # (no in-kernel transpose); cast operands once if a narrow MXU dtype is used.
    wT = weight.T
    xp = x
    if mxu_dtype is not None:
        xp = xp.astype(mxu_dtype)
        wT = wT.astype(mxu_dtype)
    op_dtype = xp.dtype
    sublane = 16 if jnp.dtype(op_dtype).itemsize == 2 else 8

    # --- tile plan: lane-dense N (x128), sublane-aligned M, balanced K chunks ---
    tm, M_pad = _tile_dim(M, tm_max, sublane)
    tn, N_pad = _tile_dim(N, tn_max, 128)
    if K <= tk_max:
        tk, K_pad = K, K             # full-dim block: no K padding / alignment needed
    else:
        tk, K_pad = _tile_dim(K, tk_max, 128)

    # Zero padding (exact: padded K columns contribute 0, padded N cols sliced off).
    if M_pad != M or K_pad != K:
        xp = jnp.pad(xp, ((0, M_pad - M), (0, K_pad - K)))
    if K_pad != K or N_pad != N:
        wT = jnp.pad(wT, ((0, K_pad - K), (0, N_pad - N)))
    bp = bias.astype(jnp.float32)
    if N_pad != N:
        bp = jnp.pad(bp, (0, N_pad - N))
    bp = bp.reshape(1, N_pad)

    grid = (M_pad // tm, N_pad // tn, K_pad // tk)

    if vmem_limit_bytes is None:
        vmem_limit_bytes = _auto_vmem_limit()

    f32_out = jnp.dtype(out_dtype) == jnp.dtype(jnp.float32)
    kernel = _kernel_acc_in_out if f32_out else _kernel_scratch_acc
    scratch = [] if f32_out else [pltpu.VMEM((tm, tn), jnp.float32)]

    out = pl.pallas_call(
        kernel,
        out_shape=jax.ShapeDtypeStruct((M_pad, N_pad), out_dtype),
        grid_spec=pltpu.PrefetchScalarGridSpec(
            num_scalar_prefetch=0,
            grid=grid,
            in_specs=[
                pl.BlockSpec((tm, tk), lambda i, j, k: (i, k)),   # x   (M, K)
                pl.BlockSpec((tk, tn), lambda i, j, k: (k, j)),   # w.T (K, N)
                pl.BlockSpec((1, tn), lambda i, j, k: (0, j)),    # bias(1, N)
            ],
            out_specs=pl.BlockSpec((tm, tn), lambda i, j, k: (i, j)),
            scratch_shapes=scratch,
        ),
        compiler_params=pltpu.CompilerParams(
            dimension_semantics=("parallel", "parallel", "arbitrary"),
            vmem_limit_bytes=vmem_limit_bytes,
        ),
    )(xp, wT, bp)

    if M_pad == M and N_pad == N:
        return out
    return out[:M, :N]


def init_bayes_linear_params(key, n_inputs: int, n_outputs: int, init_log_var: float = -6.0):
    """Deterministic synthetic init mirroring BayesLinear.reset_parameters().

    Only the parameters used by the pre_train forward (sampled_weights,
    sampled_biases) matter; others are created for shape fidelity.
    """
    k_w, k_sw, k_b, k_sb = jax.random.split(key, 4)
    fan_in = n_inputs
    w_bound = 1.0 / math.sqrt(fan_in)   # kaiming_uniform_(a=sqrt(5)) bound
    b_bound = 1.0 / math.sqrt(fan_in)

    return {
        "weight": jax.random.uniform(k_w, (n_outputs, n_inputs), jnp.float32, -w_bound, w_bound),
        "weight_isp_std": jnp.full((n_outputs, n_inputs), init_log_var, jnp.float32),
        "sampled_weights": jax.random.uniform(k_sw, (n_outputs, n_inputs), jnp.float32, -w_bound, w_bound),
        "bias_mean": jax.random.uniform(k_b, (n_outputs,), jnp.float32, -b_bound, b_bound),
        "bias_isp_std": jnp.full((n_outputs,), init_log_var, jnp.float32),
        "sampled_biases": jax.random.uniform(k_sb, (n_outputs,), jnp.float32, -b_bound, b_bound),
    }


if __name__ == "__main__":
    key = jax.random.PRNGKey(0)
    k_params, k_x, k_x2, k_w2, k_b2 = jax.random.split(key, 5)

    # --- Case 1: shapes consistent with an SVI-MLP layer (pre_train forward) ---
    batch, n_inputs, n_outputs = 8, 32, 64
    params = init_bayes_linear_params(k_params, n_inputs, n_outputs, init_log_var=-6.0)
    x = jax.random.normal(k_x, (batch, n_inputs), jnp.float32)

    y = bayes_linear_forward(x, params["sampled_weights"], params["sampled_biases"])
    y = jax.block_until_ready(y)
    y_ref = x @ params["sampled_weights"].T + params["sampled_biases"]
    assert y.shape == (batch, n_outputs)
    assert jnp.allclose(y, y_ref, atol=1e-5, rtol=1e-5), "f32 mismatch vs reference"

    # bf16 operand path (v6e/v7x MXU rate); f32 accumulation, looser tolerance.
    # NOTE: bf16 rounding of sampled weights can swamp posterior stds ~1e-3;
    # this path is opt-in.
    y_bf16 = jax.block_until_ready(
        bayes_linear_forward(x, params["sampled_weights"], params["sampled_biases"],
                             mxu_dtype=jnp.bfloat16))
    assert jnp.allclose(y_bf16, y_ref, atol=5e-2, rtol=5e-2), "bf16 mismatch vs reference"

    # --- Case 2: exercise the tiled grid + K-reduction accumulator + padding ---
    M2, K2, N2 = 16, 300, 200
    x2 = jax.random.normal(k_x2, (M2, K2), jnp.float32)
    w2 = jax.random.normal(k_w2, (N2, K2), jnp.float32) * 0.05
    b2 = jax.random.normal(k_b2, (N2,), jnp.float32) * 0.05
    y2 = jax.block_until_ready(
        bayes_linear_forward(x2, w2, b2, tm_max=8, tn_max=128, tk_max=128))
    y2_ref = x2 @ w2.T + b2
    assert y2.shape == (M2, N2)
    assert jnp.allclose(y2, y2_ref, atol=1e-4, rtol=1e-4), "tiled-grid mismatch vs reference"

    # --- Case 3: 16-bit input dtype (exercises the scratch-accumulator path
    #             and 16-row sublane alignment) ---
    x3 = x.astype(jnp.bfloat16)
    w3 = params["sampled_weights"].astype(jnp.bfloat16)
    y3 = jax.block_until_ready(
        bayes_linear_forward(x3, w3, params["sampled_biases"]))
    y3_ref = (x3.astype(jnp.float32) @ w3.astype(jnp.float32).T
              + params["sampled_biases"]).astype(jnp.bfloat16)
    assert y3.dtype == jnp.bfloat16
    assert jnp.allclose(y3.astype(jnp.float32), y3_ref.astype(jnp.float32),
                        atol=5e-2, rtol=5e-2), "bf16-input mismatch vs reference"

    # TODO(synk): the sample()/sample_once branch (softplus(std)*eps weight sampling)
    # and kl_with_prior() are stateful training-time utilities; they could be fused
    # into this kernel via pltpu.prng_seed/prng_random_bits but are left in plain JAX.

    print("KERNEL_OK")
</pallas_src>

<mosaic_0001>
module attributes {stable_mosaic.version = 11 : i64} {
  func.func @_kernel_acc_in_out(%arg0: i32, %arg1: i32, %arg2: i32, %arg3: memref<8x32xf32, #tpu.memory_space<vmem>>, %arg4: memref<32x128xf32, #tpu.memory_space<vmem>>, %arg5: memref<1x128xf32, #tpu.memory_space<vmem>>, %arg6: memref<8x128xf32, #tpu.memory_space<vmem>>) attributes {dimension_semantics = [#tpu.dimension_semantics<parallel>, #tpu.dimension_semantics<parallel>, #tpu.dimension_semantics<arbitrary>], iteration_bounds = array<i64: 1, 1, 1>, scalar_prefetch = 0 : i64, scratch_operands = 0 : i64, tpu.core_type = #tpu.core_type<tc>, window_params = [{transform_indices = @transform_0, window_bounds = array<i64: 8, 32>}, {transform_indices = @transform_1, window_bounds = array<i64: 32, 128>}, {transform_indices = @transform_2, window_bounds = array<i64: 1, 128>}, {transform_indices = @transform_3, window_bounds = array<i64: 8, 128>}]} {
    %c0_i32 = arith.constant 0 : i32
    %0 = arith.cmpi eq, %arg2, %c0_i32 : i32
    %1 = arith.extui %0 : i1 to i32
    %c0_i32_0 = arith.constant 0 : i32
    %2 = arith.cmpi ne, %1, %c0_i32_0 : i32
    scf.if %2 {
      %c0_8 = arith.constant 0 : index
      %c0_9 = arith.constant 0 : index
      %9 = vector.load %arg5[%c0_8, %c0_9] : memref<1x128xf32, #tpu.memory_space<vmem>>, vector<1x128xf32>
      %10 = vector.shape_cast %9 : vector<1x128xf32> to vector<1x128xf32>
      %11 = vector.broadcast %10 : vector<1x128xf32> to vector<8x128xf32>
      %c0_10 = arith.constant 0 : index
      %c0_11 = arith.constant 0 : index
      %12 = vector.load %arg6[%c0_10, %c0_11] : memref<8x128xf32, #tpu.memory_space<vmem>>, vector<8x128xf32>
      tpu.vector_store %arg6[%c0_10, %c0_11], %11 {strides = array<i32>} : memref<8x128xf32, #tpu.memory_space<vmem>>, vector<8x128xf32>,
    } else {
    }
    %c0 = arith.constant 0 : index
    %c0_1 = arith.constant 0 : index
    %3 = vector.load %arg6[%c0, %c0_1] : memref<8x128xf32, #tpu.memory_space<vmem>>, vector<8x128xf32>
    %c0_2 = arith.constant 0 : index
    %c0_3 = arith.constant 0 : index
    %4 = vector.load %arg3[%c0_2, %c0_3] : memref<8x32xf32, #tpu.memory_space<vmem>>, vector<8x32xf32>
    %c0_4 = arith.constant 0 : index
    %c0_5 = arith.constant 0 : index
    %5 = vector.load %arg4[%c0_4, %c0_5] : memref<32x128xf32, #tpu.memory_space<vmem>>, vector<32x128xf32>
    %cst = arith.constant dense<0.000000e+00> : vector<8x128xf32>
    %6 = tpu.matmul %4, %5, %cst {dimension_numbers = #tpu.dot_dimension_numbers<[1], [0], [0], [1], [0, 0, 1, 1], [], []>} : vector<8x32xf32>, vector<32x128xf32>, vector<8x128xf32> -> vector<8x128xf32>
    %7 = arith.addf %3, %6 : vector<8x128xf32>
    %c0_6 = arith.constant 0 : index
    %c0_7 = arith.constant 0 : index
    %8 = vector.load %arg6[%c0_6, %c0_7] : memref<8x128xf32, #tpu.memory_space<vmem>>, vector<8x128xf32>
    tpu.vector_store %arg6[%c0_6, %c0_7], %7 {strides = array<i32>} : memref<8x128xf32, #tpu.memory_space<vmem>>, vector<8x128xf32>,
    return
  }
  func.func @transform_0(%arg0: i32, %arg1: i32, %arg2: i32) -> (i32, i32) {
    %c0_i32 = arith.constant 0 : i32
    return %arg0, %arg2 : i32, i32
  }
  func.func @transform_1(%arg0: i32, %arg1: i32, %arg2: i32) -> (i32, i32) {
    %c0_i32 = arith.constant 0 : i32
    return %arg2, %arg1 : i32, i32
  }
  func.func @transform_2(%arg0: i32, %arg1: i32, %arg2: i32) -> (i32, i32) {
    %c0_i32 = arith.constant 0 : i32
    %c0_i32_0 = arith.constant 0 : i32
    return %c0_i32, %arg1 : i32, i32
  }
  func.func @transform_3(%arg0: i32, %arg1: i32, %arg2: i32) -> (i32, i32) {
    %c0_i32 = arith.constant 0 : i32
    return %arg0, %arg1 : i32, i32
  }
}

</mosaic_0001>

<llo_original>
// kernel: tpu_custom_call.1
$region0: #{tpu_custom_call.1}
  #allocation0 [shape = 'u32[]', space=smem, size = 0x4, offset = 0x4, fixed_abs, tag = 'smem constant byte address 0x4 - core index']
  #allocation1 [shape = 'u32[144,128]{1,0:T(1,128)}', space=vmem, size = 0x12000, scoped, tag = 'internal scratch']
  %s0 = inlined_call_operand.hbm [shape: f32[8,32], index: 0, kind: input, shape index: {}]
  %s1 = inlined_call_operand.hbm [shape: f32[32,128], index: 1, kind: input, shape index: {}]
  %s2 = inlined_call_operand.vmem [shape: f32[1,128], index: 2, kind: input, shape index: {}]
  %s3 = inlined_call_operand.hbm [shape: f32[8,128], index: 3, kind: output, shape index: {}]
  %s4 = sld [smem:[#allocation0]]
  $region34: #{tpu_custom_call.1} parent=0
    _
  %s6 = ssub.s32 1, %s4
  %s7 = scalar_select 0, %s6, %s4
  $region1: #{tpu_custom_call.1} parent=0
    #allocation2 [shape = 'u8[4096]{0}', space=vmem, size = 0x1000, scoped, tag = 'input window, operand 0, single buffered']
    #allocation3 [shape = 's32[1]{0}', space=sflag, size = 0x4, scoped, tag = 'scoped memory for tpu_custom_call.1']
    #allocation4 [shape = 's32[1]{0}', space=sflag, size = 0x4, scoped, tag = 'scoped memory for tpu_custom_call.1']
    #allocation5 [shape = 'u8[16384]{0}', space=vmem, size = 0x4000, scoped, tag = 'input window, operand 1, single buffered']
    #allocation6 [shape = 's32[1]{0}', space=sflag, size = 0x4, scoped, tag = 'scoped memory for tpu_custom_call.1']
    #allocation7 [shape = 'u8[4096]{0}', space=vmem, size = 0x1000, scoped, tag = 'output window, operand 0, single buffered']
    %8 = vsyncpa [#allocation3], 0
    %9 = vsyncpa [#allocation6], 0
    %10 = vsyncpa [#allocation4], 0
    // Predicated region
    $region2: #{tpu_custom_call.1} parent=1 // pred_check
      _
    $region3: #{tpu_custom_call.1} parent=1 // pred_check_branch
      %12 = sbr.rel (0) target = $region5
    $region4: #{tpu_custom_call.1} parent=1 // pred_region
      %s14 = ssub.s32 128, 128
      %15 = vsyncadd [#allocation3], %s14
      %s17 = sshll.u32 [#allocation2], 4
      %s18 = int_to_ptr.vmem [resolvable:$true] %s17
      %20 = dma.hbm_to_vmem [thread:$0]  %s0, 128, %s18, [#allocation3]
    $region5: #{tpu_custom_call.1} parent=1 // pred_fallthru
      _
    // Predicated region
    $region6: #{tpu_custom_call.1} parent=1 // pred_check
      _
    $region7: #{tpu_custom_call.1} parent=1 // pred_check_branch
      %22 = sbr.rel (0) target = $region9
    $region8: #{tpu_custom_call.1} parent=1 // pred_region
      %s24 = ssub.s32 512, 512
      %25 = vsyncadd [#allocation6], %s24
      %s26 = sshll.u32 [#allocation5], 4
      %s27 = int_to_ptr.vmem [resolvable:$true] %s26
      %32 = dma.hbm_to_vmem [thread:$0]  %s1, 512, %s27, [#allocation6], 128, 128, 8
    $region9: #{tpu_custom_call.1} parent=1 // pred_fallthru
      _
    // Predicated region
    $region10: #{tpu_custom_call.1} parent=1 // pred_check
      _
    $region11: #{tpu_custom_call.1} parent=1 // pred_check_branch
      %34 = sbr.rel (0) target = $region13
    $region12: #{tpu_custom_call.1} parent=1 // pred_region
      _
    $region13: #{tpu_custom_call.1} parent=1 // pred_fallthru
      _
    // Predicated region
    $region14: #{tpu_custom_call.1} parent=1 // pred_check
      _
    $region15: #{tpu_custom_call.1} parent=1 // pred_check_branch
      %36 = sbr.rel (0) target = $region17
    $region16: #{tpu_custom_call.1} parent=1 // pred_region
      %37 = dma.done [#allocation3], 128
    $region17: #{tpu_custom_call.1} parent=1 // pred_fallthru
      _
    // Predicated region
    $region18: #{tpu_custom_call.1} parent=1 // pred_check
      _
    $region19: #{tpu_custom_call.1} parent=1 // pred_check_branch
      %39 = sbr.rel (0) target = $region21
    $region20: #{tpu_custom_call.1} parent=1 // pred_region
      %40 = dma.done [#allocation6], 512
    $region21: #{tpu_custom_call.1} parent=1 // pred_fallthru
      _
    %p41 = scmp.eq.s32.totalorder 0, 0
    // Predicated region
    $region22: #{tpu_custom_call.1} parent=1 // pred_check
      %p42 = pneg %p41
    $region23: #{tpu_custom_call.1} parent=1 // pred_check_branch
      %44 = sbr.rel (%p42) target = $region25
    $region24: #{tpu_custom_call.1} parent=1 // pred_region
      %v45 = vld [vmem:[%s2] sm:$0x1]
      %v47 = vlaneseq
      %v48 = vshrl.u32 %v47, 7
      %v49 = vsub.s32 0, %v48
      %v50 = vrot.slane %v45, %v49
      %52 = vst [vmem:[#allocation7] sm:$0xff] %v50
    $region25: #{tpu_custom_call.1} parent=1 // pred_fallthru
      _
    %v53 = vld [vmem:[#allocation7] sm:$0xff]
    %v54 = vld [vmem:[#allocation2] sm:$0xff]
    %v55 = vld [vmem:[#allocation5] sm:$0xff]
    %v56 = vld [vmem:[#allocation5 + $0x8] sm:$0xff]
    %v57 = vld [vmem:[#allocation5 + $0x10] sm:$0xff]
    %v58 = vld [vmem:[#allocation5 + $0x18] sm:$0xff]
    %vm59 = vcmask 261120
    %v61 = vsel %vm59, %v54, 0
    %63 = vmatprep.subr.mxu0 0.0
    %64 = vmatpush1.msra.mxu0 %v55
    %65 = vmatprep.subr.mxu0 0.0
    %66 = vmatpush1.msra.mxu0 %v56
    %67 = vmatprep.subr.mxu0 0.0
    %68 = vmatpush1.msra.mxu0 %v57
    %69 = vmatprep.subr.mxu0 0.0
    %70 = vmatpush1.msra.mxu0 %v58
    %71 = vmatprep.subr.mxu0 0.0
    %72 = vmatpush1.msra.mxu0 0.0
    %73 = vmatprep.subr.mxu0 0.0
    %74 = vmatpush1.msra.mxu0 0.0
    %75 = vmatprep.subr.mxu0 0.0
    %76 = vmatpush1.msra.mxu0 0.0
    %77 = vmatprep.subr.mxu0 0.0
    %78 = vmatpush1.msra.mxu0 0.0
    %79 = vmatprep.subr.mxu0 0.0
    %80 = vmatpush1.msra.mxu0 0.0
    %81 = vmatprep.subr.mxu0 0.0
    %82 = vmatpush1.msra.mxu0 0.0
    %83 = vmatprep.subr.mxu0 0.0
    %84 = vmatpush1.msra.mxu0 0.0
    %85 = vmatprep.subr.mxu0 0.0
    %86 = vmatpush1.msra.mxu0 0.0
    %87 = vmatprep.subr.mxu0 0.0
    %88 = vmatpush1.msra.mxu0 0.0
    %89 = vmatprep.subr.mxu0 0.0
    %90 = vmatpush1.msra.mxu0 0.0
    %91 = vmatprep.subr.mxu0 0.0
    %92 = vmatpush1.msra.mxu0 0.0
    %93 = vmatprep.subr.mxu0 0.0
    %94 = vmatpush1.msra.mxu0 0.0
    %95 = vmatprep.subr.mxu0 0.0
    %96 = vmatpush1.msra.mxu0 0.0
    %97 = vmatprep.subr.mxu0 0.0
    %98 = vmatpush1.msra.mxu0 0.0
    %99 = vmatprep.subr.mxu0 0.0
    %100 = vmatpush1.msra.mxu0 0.0
    %101 = vmatprep.subr.mxu0 0.0
    %102 = vmatpush1.msra.mxu0 0.0
    %103 = vmatprep.subr.mxu0 0.0
    %104 = vmatpush1.msra.mxu0 0.0
    %105 = vmatprep.subr.mxu0 0.0
    %106 = vmatpush1.msra.mxu0 0.0
    %107 = vmatprep.subr.mxu0 0.0
    %108 = vmatpush1.msra.mxu0 0.0
    %109 = vmatprep.subr.mxu0 0.0
    %110 = vmatpush1.msra.mxu0 0.0
    %111 = vmatprep.subr.mxu0 0.0
    %112 = vmatpush1.msra.mxu0 0.0
    %113 = vmatprep.subr.mxu0 0.0
    %114 = vmatpush1.msra.mxu0 0.0
    %115 = vmatprep.subr.mxu0 0.0
    %116 = vmatpush1.msra.mxu0 0.0
    %117 = vmatprep.subr.mxu0 0.0
    %118 = vmatpush1.msra.mxu0 0.0
    %119 = vmatprep.subr.mxu0 0.0
    %120 = vmatpush1.msra.mxu0 0.0
    %121 = vmatprep.subr.mxu0 0.0
    %122 = vmatpush1.msra.mxu0 0.0
    %123 = vmatprep.subr.mxu0 0.0
    %124 = vmatpush1.msra.mxu0 0.0
    %125 = vmatprep.subr.mxu0 0.0
    %126 = vmatpush1.msra.mxu0 0.0
    %127 = vmatprep.mubr.f32.mxu0 0.0
    %128 = vmatmul.mubr.f32.gmra.mrb[0].mxu0 %v61
    %v129 = vpop.f32.mrb[0].mxu0
    %v130 = vadd.f32 0.0, %v129
    %v131 = vpop.f32.mrb[0].mxu0
    %132 = vdwg.mxu0
    %v133 = vadd.f32 %v53, %v130
    %134 = vst [vmem:[#allocation7] sm:$0xff] %v133
    // Predicated region
    $region26: #{tpu_custom_call.1} parent=1 // pred_check
      _
    $region27: #{tpu_custom_call.1} parent=1 // pred_check_branch
      %136 = sbr.rel (0) target = $region29
    $region28: #{tpu_custom_call.1} parent=1 // pred_region
      %s138 = ssub.s32 128, 128
      %139 = vsyncadd [#allocation4], %s138
      %s141 = sshll.u32 [#allocation7], 4
      %s142 = int_to_ptr.vmem [resolvable:$true] %s141
      %144 = dma.vmem_to_hbm [thread:$0]  %s142, 128, %s3, [#allocation4]
    $region29: #{tpu_custom_call.1} parent=1 // pred_fallthru
      _
    // Predicated region
    $region30: #{tpu_custom_call.1} parent=1 // pred_check
      _
    $region31: #{tpu_custom_call.1} parent=1 // pred_check_branch
      %146 = sbr.rel (0) target = $region33
    $region32: #{tpu_custom_call.1} parent=1 // pred_region
      %147 = dma.done [#allocation4], 128
    $region33: #{tpu_custom_call.1} parent=1 // pred_fallthru
      _
    %148 = vsyncpa [#allocation3], 1
    %149 = vsyncpa [#allocation6], 1
    %150 = vsyncpa [#allocation4], 1

</llo_original>
